<compile_context>
chip_gen: v5e
topology: v5e:2x2
jax: 0.10.0
libtpu: 0.0.40
codegen_flags: <defaults>
</compile_context>

<pallas_src>
import math
import functools

import jax
import jax.numpy as jnp
from jax.experimental import pallas as pl
from jax.experimental.pallas import tpu as pltpu


def _round_up(x, m):
    return (x + m - 1) // m * m


def _pick_hidden_tile(h_pad):
    """Largest multiple-of-128 tile <= 512 that divides h_pad."""
    for cand in (512, 384, 256, 128):
        if cand <= h_pad and h_pad % cand == 0:
            return cand
    return h_pad


def _pick_batch_tile(n_pad):
    """Largest multiple-of-8 divisor of n_pad that is <= 256 (n_pad % 8 == 0)."""
    best = 8
    d = 8
    while d <= min(n_pad, 256):
        if n_pad % d == 0:
            best = d
        d += 8
    return best


def _spec(block_shape, index_map, single_buffer):
    """BlockSpec; single-buffer operands whose block never changes across the
    grid (double-buffering a constant block only wastes VMEM)."""
    if single_buffer:
        try:
            return pl.BlockSpec(block_shape, index_map,
                                pipeline_mode=pl.Buffered(1))
        except (TypeError, AttributeError):
            pass  # older jax without pipeline_mode / Buffered
    return pl.BlockSpec(block_shape, index_map)


def _rnn_cell_kernel(x_ref, h_ref, wih_ref, whh_ref, b_ref, out_ref):
    # Two MXU dots over the same output tile, f32 accumulation; bias-add on the
    # VPU and tanh on the EUP as the epilogue.  Activation cast to the weight
    # compute dtype (bf16) happens here (no extra wrapper pass over HBM).
    cdt = wih_ref.dtype
    acc = jnp.dot(x_ref[...].astype(cdt), wih_ref[...],
                  preferred_element_type=jnp.float32)
    acc = acc + jnp.dot(h_ref[...].astype(cdt), whh_ref[...],
                        preferred_element_type=jnp.float32)
    out_ref[...] = jnp.tanh(acc + b_ref[...]).astype(out_ref.dtype)


def prepare_params(w_ih, w_hh, b_ih=None, b_hh=None, compute_dtype=jnp.bfloat16):
    """One-time weight prep (outside the per-step hot path).

    w_ih: (H, I), w_hh: (H, H), b_ih/b_hh: (H,) or None  (PyTorch convention)

    Returns (w_ih_t, w_hh_t, bias_row, input_size, hidden_size):
      w_ih_t:   (I, H_pad)  transposed, bf16, zero-padded to 128 output lanes
      w_hh_t:   (H, H_pad)  transposed, bf16, zero-padded to 128 output lanes
      bias_row: (1, H_pad)  f32, b_ih + b_hh, zero-padded
    """
    hidden_size, input_size = int(w_ih.shape[0]), int(w_ih.shape[1])
    h_pad = _round_up(max(hidden_size, 1), 128)

    w_ih_t = jnp.pad(w_ih.T.astype(compute_dtype),
                     ((0, 0), (0, h_pad - hidden_size)))
    w_hh_t = jnp.pad(w_hh.T.astype(compute_dtype),
                     ((0, 0), (0, h_pad - hidden_size)))

    if b_ih is None:
        b = jnp.zeros((hidden_size,), jnp.float32)
    else:
        b = (b_ih.astype(jnp.float32) + b_hh.astype(jnp.float32))
    bias_row = jnp.pad(b, (0, h_pad - hidden_size)).reshape(1, h_pad)

    return w_ih_t, w_hh_t, bias_row, input_size, hidden_size


@functools.partial(jax.jit, static_argnames=("hidden_size",))
def _rnn_cell_core(x, h_prev, w_ih_t, w_hh_t, bias_row, *, hidden_size):
    """Batched core: x (N, I), h_prev (N, H) -> h (N, H)."""
    n, input_size = x.shape
    h_pad = w_ih_t.shape[1]

    # ---- batch tiling: pad only when we actually have to tile ----
    if n <= 512:
        n_pad, tn = n, n                      # single full-extent batch tile
    else:
        n_pad = _round_up(n, 8)
        tn = _pick_batch_tile(n_pad)
        if n_pad != n:
            x = jnp.pad(x, ((0, n_pad - n), (0, 0)))
            h_prev = jnp.pad(h_prev, ((0, n_pad - n), (0, 0)))

    tnh = _pick_hidden_tile(h_pad)            # hidden/output tile (lane-dense)
    nh = h_pad // tnh
    nb = n_pad // tn
    grid = (nh, nb)                           # hidden outer (weights stream once)

    resident_act = (nb == 1)                  # constant block index across grid
    resident_w = (nh == 1)

    act_isz = x.dtype.itemsize
    w_isz = w_ih_t.dtype.itemsize
    k = input_size + hidden_size

    # VMEM budget derived from the actual buffers (x, h, W_ih, W_hh, bias, out),
    # with 2x headroom, floored at 16 MiB and capped at 56 MiB (v7x-safe).
    vmem_needed = ((1 if resident_act else 2) * tn * k * act_isz
                   + (1 if resident_w else 2) * k * tnh * w_isz
                   + (1 if resident_w else 2) * tnh * 4
                   + 2 * tn * tnh * 4)
    vmem_limit = int(min(max(2 * vmem_needed + (4 << 20), 16 << 20), 56 << 20))

    cost = pl.CostEstimate(
        flops=2 * n_pad * k * h_pad,
        transcendentals=n_pad * h_pad,
        bytes_accessed=(n_pad * k * act_isz + k * h_pad * w_isz
                        + h_pad * 4 + n_pad * h_pad * 4),
    )

    out = pl.pallas_call(
        _rnn_cell_kernel,
        out_shape=jax.ShapeDtypeStruct((n_pad, h_pad), jnp.float32),
        grid_spec=pltpu.PrefetchScalarGridSpec(
            num_scalar_prefetch=0,
            grid=grid,
            in_specs=[
                # activations: tiled over the batch axis (inner/fast grid axis)
                _spec((tn, input_size), lambda j, i: (i, 0), resident_act),
                _spec((tn, hidden_size), lambda j, i: (i, 0), resident_act),
                # transposed, lane-padded weights: tiled over the hidden axis
                _spec((input_size, tnh), lambda j, i: (0, j), resident_w),
                _spec((hidden_size, tnh), lambda j, i: (0, j), resident_w),
                # combined bias row
                _spec((1, tnh), lambda j, i: (0, j), resident_w),
            ],
            out_specs=pl.BlockSpec((tn, tnh), lambda j, i: (i, j)),
        ),
        compiler_params=pltpu.CompilerParams(
            dimension_semantics=("parallel", "parallel"),
            vmem_limit_bytes=vmem_limit,
        ),
        cost_estimate=cost,
    )(x, h_prev, w_ih_t, w_hh_t, bias_row)

    # Strip batch / lane padding.
    return out[:n, :hidden_size]


def rnn_cell_forward(x, h_prev, params):
    """h = tanh(x @ W_ih.T + b_ih + h_prev @ W_hh.T + b_hh)

    x:      (N, input_size) or (input_size,)
    h_prev: (N, hidden_size) or (hidden_size,) or None (-> zeros)
    params: output of prepare_params(...)
    """
    w_ih_t, w_hh_t, bias_row, _input_size, hidden_size = params
    is_batched = x.ndim == 2
    if not is_batched:
        x = x[None, :]
        if h_prev is not None:
            h_prev = h_prev[None, :]
    if h_prev is None:
        h_prev = jnp.zeros((x.shape[0], hidden_size), jnp.float32)
    h = _rnn_cell_core(x, h_prev, w_ih_t, w_hh_t, bias_row,
                       hidden_size=hidden_size)
    if not is_batched:
        h = h[0]
    return h


def init_params(key, input_size, hidden_size):
    """Deterministic parameter init matching RNNCellBase: U(-sqrt(k), sqrt(k))."""
    k = 1.0 / hidden_size if hidden_size > 0 else 0.0
    bound = math.sqrt(k)
    k1, k2, k3, k4 = jax.random.split(key, 4)
    w_ih = jax.random.uniform(k1, (hidden_size, input_size), jnp.float32, -bound, bound)
    w_hh = jax.random.uniform(k2, (hidden_size, hidden_size), jnp.float32, -bound, bound)
    b_ih = jax.random.uniform(k3, (hidden_size,), jnp.float32, -bound, bound)
    b_hh = jax.random.uniform(k4, (hidden_size,), jnp.float32, -bound, bound)
    return w_ih, w_hh, b_ih, b_hh


if __name__ == "__main__":
    # Small shapes consistent with the module's forward.
    batch = 8
    input_size = 16
    hidden_size = 32

    key = jax.random.PRNGKey(0)
    kx, kh, kp = jax.random.split(key, 3)

    x = jax.random.normal(kx, (batch, input_size), jnp.float32)
    h_prev = jax.random.normal(kh, (batch, hidden_size), jnp.float32)
    w_ih, w_hh, b_ih, b_hh = init_params(kp, input_size, hidden_size)

    # Weights are prepared once (transposed / lane-padded / bf16) outside the
    # per-step hot path.
    params = prepare_params(w_ih, w_hh, b_ih, b_hh)

    # Batched path.
    h = jax.block_until_ready(rnn_cell_forward(x, h_prev, params))
    ref = jnp.tanh(x @ w_ih.T + b_ih + h_prev @ w_hh.T + b_hh)
    assert h.shape == (batch, hidden_size)
    # bf16 weights/activations with f32 accumulation -> slightly looser tol.
    assert jnp.allclose(h, ref, atol=3e-2, rtol=3e-2), float(jnp.max(jnp.abs(h - ref)))

    # Unbatched path with default (zero) hidden state, as in the module.
    h1 = jax.block_until_ready(rnn_cell_forward(x[0], None, params))
    ref1 = jnp.tanh(x[0] @ w_ih.T + b_ih + b_hh)
    assert h1.shape == (hidden_size,)
    assert jnp.allclose(h1, ref1, atol=3e-2, rtol=3e-2)

    print("KERNEL_OK")
</pallas_src>

<mosaic_0001>
module attributes {stable_mosaic.version = 11 : i64} {
  func.func @_rnn_cell_kernel(%arg0: i32, %arg1: i32, %arg2: memref<8x16xf32, #tpu.memory_space<vmem>>, %arg3: memref<8x32xf32, #tpu.memory_space<vmem>>, %arg4: memref<16x128xbf16, #tpu.memory_space<vmem>>, %arg5: memref<32x128xbf16, #tpu.memory_space<vmem>>, %arg6: memref<1x128xf32, #tpu.memory_space<vmem>>, %arg7: memref<8x128xf32, #tpu.memory_space<vmem>>) attributes {dimension_semantics = [#tpu.dimension_semantics<parallel>, #tpu.dimension_semantics<parallel>], iteration_bounds = array<i64: 1, 1>, scalar_prefetch = 0 : i64, scratch_operands = 0 : i64, tpu.core_type = #tpu.core_type<tc>, window_params = [{pipeline_mode = #tpu.pipeline_mode<synchronous>, transform_indices = @transform_0, window_bounds = array<i64: 8, 16>}, {pipeline_mode = #tpu.pipeline_mode<synchronous>, transform_indices = @transform_1, window_bounds = array<i64: 8, 32>}, {pipeline_mode = #tpu.pipeline_mode<synchronous>, transform_indices = @transform_2, window_bounds = array<i64: 16, 128>}, {pipeline_mode = #tpu.pipeline_mode<synchronous>, transform_indices = @transform_3, window_bounds = array<i64: 32, 128>}, {pipeline_mode = #tpu.pipeline_mode<synchronous>, transform_indices = @transform_4, window_bounds = array<i64: 1, 128>}, {transform_indices = @transform_5, window_bounds = array<i64: 8, 128>}]} {
    %c0 = arith.constant 0 : index
    %c0_0 = arith.constant 0 : index
    %0 = vector.load %arg2[%c0, %c0_0] : memref<8x16xf32, #tpu.memory_space<vmem>>, vector<8x16xf32>
    %1 = arith.truncf %0 : vector<8x16xf32> to vector<8x16xbf16>
    %c0_1 = arith.constant 0 : index
    %c0_2 = arith.constant 0 : index
    %2 = vector.load %arg4[%c0_1, %c0_2] : memref<16x128xbf16, #tpu.memory_space<vmem>>, vector<16x128xbf16>
    %cst = arith.constant dense<0.000000e+00> : vector<8x128xf32>
    %3 = tpu.matmul %1, %2, %cst {dimension_numbers = #tpu.dot_dimension_numbers<[1], [0], [0], [1], [0, 0, 1, 1], [], []>} : vector<8x16xbf16>, vector<16x128xbf16>, vector<8x128xf32> -> vector<8x128xf32>
    %c0_3 = arith.constant 0 : index
    %c0_4 = arith.constant 0 : index
    %4 = vector.load %arg3[%c0_3, %c0_4] : memref<8x32xf32, #tpu.memory_space<vmem>>, vector<8x32xf32>
    %5 = arith.truncf %4 : vector<8x32xf32> to vector<8x32xbf16>
    %c0_5 = arith.constant 0 : index
    %c0_6 = arith.constant 0 : index
    %6 = vector.load %arg5[%c0_5, %c0_6] : memref<32x128xbf16, #tpu.memory_space<vmem>>, vector<32x128xbf16>
    %cst_7 = arith.constant dense<0.000000e+00> : vector<8x128xf32>
    %7 = tpu.matmul %5, %6, %cst_7 {dimension_numbers = #tpu.dot_dimension_numbers<[1], [0], [0], [1], [0, 0, 1, 1], [], []>} : vector<8x32xbf16>, vector<32x128xbf16>, vector<8x128xf32> -> vector<8x128xf32>
    %8 = arith.addf %3, %7 : vector<8x128xf32>
    %c0_8 = arith.constant 0 : index
    %c0_9 = arith.constant 0 : index
    %9 = vector.load %arg6[%c0_8, %c0_9] : memref<1x128xf32, #tpu.memory_space<vmem>>, vector<1x128xf32>
    %10 = vector.broadcast %9 : vector<1x128xf32> to vector<8x128xf32>
    %11 = arith.addf %8, %10 : vector<8x128xf32>
    %12 = math.tanh %11 : vector<8x128xf32>
    %c0_10 = arith.constant 0 : index
    %c0_11 = arith.constant 0 : index
    %13 = vector.load %arg7[%c0_10, %c0_11] : memref<8x128xf32, #tpu.memory_space<vmem>>, vector<8x128xf32>
    tpu.vector_store %arg7[%c0_10, %c0_11], %12 {strides = array<i32>} : memref<8x128xf32, #tpu.memory_space<vmem>>, vector<8x128xf32>,
    return
  }
  func.func @transform_0(%arg0: i32, %arg1: i32) -> (i32, i32) {
    %c0_i32 = arith.constant 0 : i32
    %c0_i32_0 = arith.constant 0 : i32
    return %arg1, %c0_i32 : i32, i32
  }
  func.func @transform_1(%arg0: i32, %arg1: i32) -> (i32, i32) {
    %c0_i32 = arith.constant 0 : i32
    %c0_i32_0 = arith.constant 0 : i32
    return %arg1, %c0_i32 : i32, i32
  }
  func.func @transform_2(%arg0: i32, %arg1: i32) -> (i32, i32) {
    %c0_i32 = arith.constant 0 : i32
    %c0_i32_0 = arith.constant 0 : i32
    return %c0_i32, %arg0 : i32, i32
  }
  func.func @transform_3(%arg0: i32, %arg1: i32) -> (i32, i32) {
    %c0_i32 = arith.constant 0 : i32
    %c0_i32_0 = arith.constant 0 : i32
    return %c0_i32, %arg0 : i32, i32
  }
  func.func @transform_4(%arg0: i32, %arg1: i32) -> (i32, i32) {
    %c0_i32 = arith.constant 0 : i32
    %c0_i32_0 = arith.constant 0 : i32
    return %c0_i32, %arg0 : i32, i32
  }
  func.func @transform_5(%arg0: i32, %arg1: i32) -> (i32, i32) {
    %c0_i32 = arith.constant 0 : i32
    return %arg1, %arg0 : i32, i32
  }
}

</mosaic_0001>

<llo_original>
// kernel: _rnn_cell_core.1
$region0: #{_rnn_cell_core.1}
  #allocation0 [shape = 'u32[]', space=smem, size = 0x4, offset = 0x4, fixed_abs, tag = 'smem constant byte address 0x4 - core index']
  #allocation1 [shape = 'u32[72,128]{1,0:T(1,128)}', space=vmem, size = 0x9000, scoped, tag = 'internal scratch']
  %s0 = inlined_call_operand.hbm [shape: f32[8,16], index: 0, kind: input, shape index: {}]
  %s1 = inlined_call_operand.hbm [shape: f32[8,32], index: 1, kind: input, shape index: {}]
  %s2 = inlined_call_operand.hbm [shape: bf16[16,128], index: 2, kind: input, shape index: {}]
  %s3 = inlined_call_operand.hbm [shape: bf16[32,128], index: 3, kind: input, shape index: {}]
  %s4 = inlined_call_operand.vmem [shape: f32[1,128], index: 4, kind: input, shape index: {}]
  %s5 = inlined_call_operand.hbm [shape: f32[8,128], index: 5, kind: output, shape index: {}]
  %s6 = sld [smem:[#allocation0]]
  $region46: #{_rnn_cell_core.1} parent=0
    _
  %s8 = ssub.s32 1, %s6
  %s9 = scalar_select 0, %s8, %s6
  $region1: #{_rnn_cell_core.1} parent=0
    #allocation2 [shape = 'u8[4096]{0}', space=vmem, size = 0x1000, scoped, tag = 'input window, operand 0, single buffered']
    #allocation3 [shape = 's32[1]{0}', space=sflag, size = 0x4, scoped, tag = 'scoped memory for _rnn_cell_core.1']
    #allocation4 [shape = 's32[1]{0}', space=sflag, size = 0x4, scoped, tag = 'scoped memory for _rnn_cell_core.1']
    #allocation5 [shape = 'u8[4096]{0}', space=vmem, size = 0x1000, scoped, tag = 'input window, operand 1, single buffered']
    #allocation6 [shape = 's32[1]{0}', space=sflag, size = 0x4, scoped, tag = 'scoped memory for _rnn_cell_core.1']
    #allocation7 [shape = 'u8[4096]{0}', space=vmem, size = 0x1000, scoped, tag = 'input window, operand 2, single buffered']
    #allocation8 [shape = 'u8[8192]{0}', space=vmem, size = 0x2000, scoped, tag = 'input window, operand 3, single buffered']
    #allocation9 [shape = 's32[1]{0}', space=sflag, size = 0x4, scoped, tag = 'scoped memory for _rnn_cell_core.1']
    #allocation10 [shape = 'u8[4096]{0}', space=vmem, size = 0x1000, scoped, tag = 'output window, operand 0, single buffered']
    %10 = vsyncpa [#allocation3], 0
    %11 = vsyncpa [#allocation6], 0
    %12 = vsyncpa [#allocation9], 0
    %13 = vsyncpa [#allocation4], 0
    // Predicated region
    $region2: #{_rnn_cell_core.1} parent=1 // pred_check
      _
    $region3: #{_rnn_cell_core.1} parent=1 // pred_check_branch
      %15 = sbr.rel (0) target = $region5
    $region4: #{_rnn_cell_core.1} parent=1 // pred_region
      %17 = vsyncadd [#allocation3], 0
      %s19 = sshll.u32 %s0, 4
      %s20 = int_to_ptr.hbm [resolvable:$true] %s19
      %s21 = sshll.u32 [#allocation2], 4
      %s22 = int_to_ptr.vmem [resolvable:$true] %s21
      %24 = dma.hbm_to_vmem [thread:$0]  %s20, 128, %s22, [#allocation3]
    $region5: #{_rnn_cell_core.1} parent=1 // pred_fallthru
      _
    // Predicated region
    $region6: #{_rnn_cell_core.1} parent=1 // pred_check
      _
    $region7: #{_rnn_cell_core.1} parent=1 // pred_check_branch
      %26 = sbr.rel (0) target = $region9
    $region8: #{_rnn_cell_core.1} parent=1 // pred_region
      %28 = vsyncadd [#allocation6], 0
      %s30 = sshll.u32 %s1, 4
      %s31 = int_to_ptr.hbm [resolvable:$true] %s30
      %s32 = sshll.u32 [#allocation5], 4
      %s33 = int_to_ptr.vmem [resolvable:$true] %s32
      %35 = dma.hbm_to_vmem [thread:$0]  %s31, 128, %s33, [#allocation6]
    $region9: #{_rnn_cell_core.1} parent=1 // pred_fallthru
      _
    // Predicated region
    $region10: #{_rnn_cell_core.1} parent=1 // pred_check
      _
    $region11: #{_rnn_cell_core.1} parent=1 // pred_check_branch
      %37 = sbr.rel (0) target = $region13
    $region12: #{_rnn_cell_core.1} parent=1 // pred_region
      %39 = vsyncadd [#allocation6], 0
      %s40 = sshll.u32 %s2, 4
      %s41 = int_to_ptr.hbm [resolvable:$true] %s40
      %s42 = sshll.u32 [#allocation7], 4
      %s43 = int_to_ptr.vmem [resolvable:$true] %s42
      %48 = dma.hbm_to_vmem [thread:$0]  %s41, 128, %s43, [#allocation6], 64, 64, 4
    $region13: #{_rnn_cell_core.1} parent=1 // pred_fallthru
      _
    // Predicated region
    $region14: #{_rnn_cell_core.1} parent=1 // pred_check
      _
    $region15: #{_rnn_cell_core.1} parent=1 // pred_check_branch
      %50 = sbr.rel (0) target = $region17
    $region16: #{_rnn_cell_core.1} parent=1 // pred_region
      %52 = vsyncadd [#allocation9], 0
      %s53 = sshll.u32 %s3, 4
      %s54 = int_to_ptr.hbm [resolvable:$true] %s53
      %s55 = sshll.u32 [#allocation8], 4
      %s56 = int_to_ptr.vmem [resolvable:$true] %s55
      %61 = dma.hbm_to_vmem [thread:$0]  %s54, 256, %s56, [#allocation9], 64, 64, 4
    $region17: #{_rnn_cell_core.1} parent=1 // pred_fallthru
      _
    // Predicated region
    $region18: #{_rnn_cell_core.1} parent=1 // pred_check
      _
    $region19: #{_rnn_cell_core.1} parent=1 // pred_check_branch
      %63 = sbr.rel (0) target = $region21
    $region20: #{_rnn_cell_core.1} parent=1 // pred_region
      _
    $region21: #{_rnn_cell_core.1} parent=1 // pred_fallthru
      _
    // Predicated region
    $region22: #{_rnn_cell_core.1} parent=1 // pred_check
      _
    $region23: #{_rnn_cell_core.1} parent=1 // pred_check_branch
      %65 = sbr.rel (0) target = $region25
    $region24: #{_rnn_cell_core.1} parent=1 // pred_region
      %67 = dma.done [#allocation3], 128
    $region25: #{_rnn_cell_core.1} parent=1 // pred_fallthru
      _
    // Predicated region
    $region26: #{_rnn_cell_core.1} parent=1 // pred_check
      _
    $region27: #{_rnn_cell_core.1} parent=1 // pred_check_branch
      %69 = sbr.rel (0) target = $region29
    $region28: #{_rnn_cell_core.1} parent=1 // pred_region
      %71 = dma.done [#allocation6], 128
    $region29: #{_rnn_cell_core.1} parent=1 // pred_fallthru
      _
    // Predicated region
    $region30: #{_rnn_cell_core.1} parent=1 // pred_check
      _
    $region31: #{_rnn_cell_core.1} parent=1 // pred_check_branch
      %73 = sbr.rel (0) target = $region33
    $region32: #{_rnn_cell_core.1} parent=1 // pred_region
      %75 = dma.done [#allocation6], 128
    $region33: #{_rnn_cell_core.1} parent=1 // pred_fallthru
      _
    // Predicated region
    $region34: #{_rnn_cell_core.1} parent=1 // pred_check
      _
    $region35: #{_rnn_cell_core.1} parent=1 // pred_check_branch
      %77 = sbr.rel (0) target = $region37
    $region36: #{_rnn_cell_core.1} parent=1 // pred_region
      %79 = dma.done [#allocation9], 256
    $region37: #{_rnn_cell_core.1} parent=1 // pred_fallthru
      _
    %v81 = vld [vmem:[#allocation2] sm:$0xff]
    %v82 = vpack.c.bf16 %v81, %v81
    %v83 = vld [vmem:[#allocation7] sm:$0xf]
    %v84 = vld [vmem:[#allocation7 + $0x4] sm:$0xf]
    %v85 = vld [vmem:[#allocation5] sm:$0xff]
    %v86 = vpack.c.bf16 %v85, %v85
    %v87 = vld [vmem:[#allocation8] sm:$0xf]
    %v88 = vld [vmem:[#allocation8 + $0x4] sm:$0xf]
    %v89 = vld [vmem:[#allocation8 + $0x8] sm:$0xf]
    %v90 = vld [vmem:[#allocation8 + $0xc] sm:$0xf]
    %v95 = vunpack.c.l.b16 %v87
    %v96 = vunpack.c.l.b16 %v88
    %v97 = vunpack.c.l.b16 %v89
    %v98 = vunpack.c.l.b16 %v90
    %v99 = vpack.c.b16 %v96, %v95
    %v100 = vpack.c.b16 %v98, %v97
    %vm103 = vcmask 261120
    %v105 = vsel %vm103, %v86, 0
    %107 = vmatpush.bf16.msra.mxu0 0
    %108 = vmatpush.bf16.msra.mxu0 0
    %109 = vmatpush.bf16.msra.mxu0 0
    %110 = vmatpush.bf16.msra.mxu0 0
    %111 = vmatpush.bf16.msra.mxu0 0
    %112 = vmatpush.bf16.msra.mxu0 0
    %113 = vmatpush.bf16.msra.mxu0 %v100
    %114 = vmatpush.bf16.msra.mxu0 %v99
    %115 = vmatmul.bf16.gmra.mxu0 %v105
    %v116 = vpop.f32.mrf.mxu0
    %v117 = vadd.f32 0.0, %v116
    %v118 = vpop.f32.mrf.mxu0
    %119 = vdwg.mxu0
    %v122 = vunpack.c.l.b16 %v83
    %v123 = vunpack.c.l.b16 %v84
    %v124 = vpack.c.b16 %v123, %v122
    %vm126 = vcmask 130048
    %v128 = vsel %vm126, %v82, 0
    %130 = vmatpush.bf16.msra.mxu0 0
    %131 = vmatpush.bf16.msra.mxu0 0
    %132 = vmatpush.bf16.msra.mxu0 0
    %133 = vmatpush.bf16.msra.mxu0 0
    %134 = vmatpush.bf16.msra.mxu0 0
    %135 = vmatpush.bf16.msra.mxu0 0
    %136 = vmatpush.bf16.msra.mxu0 0
    %137 = vmatpush.bf16.msra.mxu0 %v124
    %138 = vmatmul.bf16.gmra.mxu0 %v128
    %v139 = vpop.f32.mrf.mxu0
    %v140 = vadd.f32 %v117, %v139
    %v141 = vpop.f32.mrf.mxu0
    %142 = vdwg.mxu0
    %v143 = vld [vmem:[%s4] sm:$0x1]
    %v145 = vperm.slane %v143, 0
    %v147 = vadd.f32 %v140, %v145
    %v148 = vtanh.pop %v147
    %149 = vst [vmem:[#allocation10] sm:$0xff] %v148
    // Predicated region
    $region38: #{_rnn_cell_core.1} parent=1 // pred_check
      _
    $region39: #{_rnn_cell_core.1} parent=1 // pred_check_branch
      %151 = sbr.rel (0) target = $region41
    $region40: #{_rnn_cell_core.1} parent=1 // pred_region
      %153 = vsyncadd [#allocation4], 0
      %s155 = sshll.u32 [#allocation10], 4
      %s156 = int_to_ptr.vmem [resolvable:$true] %s155
      %s157 = sshll.u32 %s5, 4
      %s158 = int_to_ptr.hbm [resolvable:$true] %s157
      %160 = dma.vmem_to_hbm [thread:$0]  %s156, 128, %s158, [#allocation4]
    $region41: #{_rnn_cell_core.1} parent=1 // pred_fallthru
      _
    // Predicated region
    $region42: #{_rnn_cell_core.1} parent=1 // pred_check
      _
    $region43: #{_rnn_cell_core.1} parent=1 // pred_check_branch
      %162 = sbr.rel (0) target = $region45
    $region44: #{_rnn_cell_core.1} parent=1 // pred_region
      %164 = dma.done [#allocation4], 128
    $region45: #{_rnn_cell_core.1} parent=1 // pred_fallthru
      _
    %165 = vsyncpa [#allocation3], 1
    %166 = vsyncpa [#allocation6], 1
    %167 = vsyncpa [#allocation9], 1
    %168 = vsyncpa [#allocation4], 1

</llo_original>
